<compile_context>
chip_gen: v5e
topology: v5e:2x2
jax: 0.10.0
libtpu: 0.0.40
codegen_flags: <defaults>
</compile_context>

<pallas_src>
import math

import jax
import jax.numpy as jnp
from jax.experimental import pallas as pl
from jax.experimental.pallas import tpu as pltpu


def _l2norm_kernel_simple(x_ref, o_ref):
    """One (block_rows, vd) tile: per-row L2 normalize via a lane (XLU) reduction."""
    x = x_ref[...]
    xf = x.astype(jnp.float32)                                   # f32 accumulate only
    ssq = jnp.sum(xf * xf, axis=-1, keepdims=True)               # (br, 1), f32
    inv = jax.lax.rsqrt(ssq).astype(x.dtype)                     # EUP slot
    o_ref[...] = (x * inv).astype(o_ref.dtype)                   # store in input dtype


def _l2norm_kernel_packed(x_ref, seg_ref, o_ref):
    """Lane-packed tile: each tile row holds `pack = W // vd` original rows side by
    side along the lane axis.  The per-original-row squared sum is a segmented lane
    reduction, computed as a block-diagonal (W, W) matmul on the MXU.  `seg` is a
    precomputed input (constant index_map -> DMA'd once, stays resident in VMEM)."""
    x = x_ref[...]
    xf = x.astype(jnp.float32)
    ssq = jnp.dot(xf * xf, seg_ref[...],
                  preferred_element_type=jnp.float32,
                  precision=jax.lax.Precision.HIGHEST)           # f32-exact, MXU idle anyway
    inv = jax.lax.rsqrt(ssq).astype(x.dtype)
    o_ref[...] = (x * inv).astype(o_ref.dtype)


def _make_seg(width, seg_width):
    """Block-diagonal ones: seg[i, j] = 1 iff floor(i/seg_width) == floor(j/seg_width)."""
    r = jnp.arange(width, dtype=jnp.int32) // seg_width
    return (r[:, None] == r[None, :]).astype(jnp.float32)


def _pick_block_rows(rows, width, itemsize, block_rows=None):
    """Row-tile size: ~4 MiB per buffer, no row cap, and >=2 grid steps for non-tiny
    inputs so dimension_semantics=("parallel",) can shard across v7x's two TCs."""
    sub = {4: 8, 2: 16, 1: 32}.get(itemsize, 8)   # sublane packing multiple
    if block_rows is not None:
        br = max(sub, (int(block_rows) // sub) * sub)
        return rows if br >= rows else br
    total = rows * width * itemsize
    if total <= (2 << 20):
        return rows                               # tiny: single full-extent block
    target = 4 << 20                              # ~4 MiB/buffer (fine on v5e/v6e/v7x)
    br = max(sub, (target // (width * itemsize)) // sub * sub)
    half = (rows // 2) // sub * sub               # guarantee >=2 steps (megacore)
    if half >= sub:
        br = min(br, half)
    return rows if br >= rows else br


def vision_model_forward(x, *, block_rows=None):
    """VisionModel.forward: L2-normalize x along its last dimension."""
    orig_shape = x.shape
    vd = orig_shape[-1]
    rows = 1
    for s in orig_shape[:-1]:
        rows *= s
    if rows == 0 or vd == 0:
        return x
    x2d = x.reshape(rows, vd)

    # Lane-dense packing whenever the feature dim is not a multiple of 128:
    # minimal pack p0 = 128 // gcd(vd, 128) makes vd*p0 a multiple of 128.
    pack = 1
    if vd % 128 != 0:
        p0 = 128 // math.gcd(vd, 128)
        if p0 > 1 and vd * p0 <= 512 and rows % p0 == 0:
            pack = p0
    R = rows // pack
    W = vd * pack
    xw = x2d.reshape(R, W)                        # free, contiguous reshape

    itemsize = jnp.dtype(x.dtype).itemsize
    br = _pick_block_rows(R, W, itemsize, block_rows)
    grid = (pl.cdiv(R, br),)

    compiler_params = pltpu.CompilerParams(
        dimension_semantics=("parallel",),        # shards grid across v7x's 2 TCs
        vmem_limit_bytes=48 * 1024 * 1024,        # 2x(in+out) 4 MiB tiles + seg << 48 MiB
    )

    if pack == 1:
        out2d = pl.pallas_call(
            _l2norm_kernel_simple,
            out_shape=jax.ShapeDtypeStruct((R, W), x.dtype),
            grid_spec=pltpu.PrefetchScalarGridSpec(
                num_scalar_prefetch=0,
                grid=grid,
                in_specs=[pl.BlockSpec((br, W), lambda i: (i, 0))],
                out_specs=pl.BlockSpec((br, W), lambda i: (i, 0)),
            ),
            compiler_params=compiler_params,
        )(xw)
    else:
        seg = _make_seg(W, vd)                    # built once, outside the grid loop
        out2d = pl.pallas_call(
            _l2norm_kernel_packed,
            out_shape=jax.ShapeDtypeStruct((R, W), x.dtype),
            grid_spec=pltpu.PrefetchScalarGridSpec(
                num_scalar_prefetch=0,
                grid=grid,
                in_specs=[pl.BlockSpec((br, W), lambda i: (i, 0)),
                          pl.BlockSpec((W, W), lambda i: (0, 0))],   # DMA'd once
                out_specs=pl.BlockSpec((br, W), lambda i: (i, 0)),
            ),
            compiler_params=compiler_params,
        )(xw, seg)

    return out2d.reshape(orig_shape)


def init_vision_model_params(key, vision_dim, num_hidden):
    """Deterministic init of the (unused-in-forward) FCNet([vision_dim, num_hidden,
    num_hidden], dropout=0.2) parameters — state-shape fidelity only, no compute."""
    k1, k2 = jax.random.split(key, 2)
    return {
        "fc_layers": {
            "layer0_w": jax.random.normal(k1, (vision_dim, num_hidden), jnp.float32) * 0.02,
            "layer0_b": jnp.zeros((num_hidden,), jnp.float32),
            "layer1_w": jax.random.normal(k2, (num_hidden, num_hidden), jnp.float32) * 0.02,
            "layer1_b": jnp.zeros((num_hidden,), jnp.float32),
            "dropout_p": 0.2,
        }
    }


if __name__ == "__main__":
    key = jax.random.PRNGKey(0)
    vision_dim = 32
    num_hidden = 16
    batch, seq = 2, 8

    # fc_layers is not used by forward() in the reference module.
    params = init_vision_model_params(key, vision_dim, num_hidden)

    def ref_l2norm(x):
        xf = x.astype(jnp.float32)
        n = jnp.sqrt(jnp.sum(xf * xf, axis=-1, keepdims=True))
        return (xf / n).astype(x.dtype)

    # Case 1: narrow feature dim -> lane-packed path (vd=32 packs 4 rows per 128 lanes).
    x1 = jax.random.normal(jax.random.fold_in(key, 1), (batch, seq, vision_dim),
                           dtype=jnp.float32)
    o1 = jax.block_until_ready(vision_model_forward(x1))
    assert o1.shape == x1.shape and o1.dtype == x1.dtype
    assert jnp.allclose(o1, ref_l2norm(x1), atol=1e-4, rtol=1e-4)

    # Case 2: wide feature dim, forced small row tile -> tiled grid with a ragged
    # (masked) last block: rows=100, block_rows=64 -> blocks of 64 and 36 rows.
    x2 = jax.random.normal(jax.random.fold_in(key, 2), (4, 25, 256), dtype=jnp.float32)
    o2 = jax.block_until_ready(vision_model_forward(x2, block_rows=64))
    assert o2.shape == x2.shape
    assert jnp.allclose(o2, ref_l2norm(x2), atol=2e-5, rtol=2e-5)

    # Case 3: bf16 input on the packed path (data path stays bf16, ssq in f32).
    x3 = jax.random.normal(jax.random.fold_in(key, 3),
                           (batch, seq, vision_dim)).astype(jnp.bfloat16)
    o3 = jax.block_until_ready(vision_model_forward(x3))
    assert o3.shape == x3.shape and o3.dtype == jnp.bfloat16
    assert jnp.allclose(o3.astype(jnp.float32), ref_l2norm(x3).astype(jnp.float32),
                        atol=2e-2, rtol=2e-2)

    # Case 4: generalized lane packing for vd=96 (not a divisor of 128): pack=4, W=384.
    x4 = jax.random.normal(jax.random.fold_in(key, 4), (batch, seq, 96), dtype=jnp.float32)
    o4 = jax.block_until_ready(vision_model_forward(x4))
    assert o4.shape == x4.shape
    assert jnp.allclose(o4, ref_l2norm(x4), atol=1e-4, rtol=1e-4)

    print("KERNEL_OK")
</pallas_src>

<mosaic_0001>
module attributes {stable_mosaic.version = 11 : i64} {
  func.func @_l2norm_kernel_packed(%arg0: i32, %arg1: memref<4x128xf32, #tpu.memory_space<vmem>>, %arg2: memref<128x128xf32, #tpu.memory_space<vmem>>, %arg3: memref<4x128xf32, #tpu.memory_space<vmem>>) attributes {dimension_semantics = [#tpu.dimension_semantics<parallel>], iteration_bounds = array<i64: 1>, scalar_prefetch = 0 : i64, scratch_operands = 0 : i64, tpu.core_type = #tpu.core_type<tc>, window_params = [{transform_indices = @transform_0, window_bounds = array<i64: 4, 128>}, {pipeline_mode = #tpu.pipeline_mode<synchronous>, transform_indices = @transform_1, window_bounds = array<i64: 128, 128>}, {transform_indices = @transform_2, window_bounds = array<i64: 4, 128>}]} {
    %c0 = arith.constant 0 : index
    %c0_0 = arith.constant 0 : index
    %0 = vector.load %arg1[%c0, %c0_0] : memref<4x128xf32, #tpu.memory_space<vmem>>, vector<4x128xf32>
    %1 = arith.mulf %0, %0 : vector<4x128xf32>
    %c0_1 = arith.constant 0 : index
    %c0_2 = arith.constant 0 : index
    %2 = vector.load %arg2[%c0_1, %c0_2] : memref<128x128xf32, #tpu.memory_space<vmem>>, vector<128x128xf32>
    %cst = arith.constant dense<0.000000e+00> : vector<4x128xf32>
    %3 = tpu.matmul %1, %2, %cst {dimension_numbers = #tpu.dot_dimension_numbers<[1], [0], [0], [1], [0, 0, 1, 1], [], []>, precision = #tpu.contract_precision<fp32>} : vector<4x128xf32>, vector<128x128xf32>, vector<4x128xf32> -> vector<4x128xf32>
    %4 = math.rsqrt %3 : vector<4x128xf32>
    %5 = arith.mulf %0, %4 : vector<4x128xf32>
    %c0_3 = arith.constant 0 : index
    %c0_4 = arith.constant 0 : index
    %6 = vector.load %arg3[%c0_3, %c0_4] : memref<4x128xf32, #tpu.memory_space<vmem>>, vector<4x128xf32>
    tpu.vector_store %arg3[%c0_3, %c0_4], %5 {strides = array<i32>} : memref<4x128xf32, #tpu.memory_space<vmem>>, vector<4x128xf32>,
    return
  }
  func.func @transform_0(%arg0: i32) -> (i32, i32) {
    %c0_i32 = arith.constant 0 : i32
    %c0_i32_0 = arith.constant 0 : i32
    return %arg0, %c0_i32 : i32, i32
  }
  func.func @transform_1(%arg0: i32) -> (i32, i32) {
    %c0_i32 = arith.constant 0 : i32
    %c0_i32_0 = arith.constant 0 : i32
    %c0_i32_1 = arith.constant 0 : i32
    return %c0_i32, %c0_i32_0 : i32, i32
  }
  func.func @transform_2(%arg0: i32) -> (i32, i32) {
    %c0_i32 = arith.constant 0 : i32
    %c0_i32_0 = arith.constant 0 : i32
    return %arg0, %c0_i32 : i32, i32
  }
}

</mosaic_0001>

<llo_original>
// kernel: tpu_custom_call.1
$region0: #{tpu_custom_call.1}
  #allocation0 [shape = 'u32[]', space=smem, size = 0x4, offset = 0x4, fixed_abs, tag = 'smem constant byte address 0x4 - core index']
  #allocation1 [shape = 'u32[72,128]{1,0:T(1,128)}', space=vmem, size = 0x9000, scoped, tag = 'internal scratch']
  %s0 = inlined_call_operand.hbm [shape: f32[4,128], index: 0, kind: input, shape index: {}]
  %s1 = inlined_call_operand.hbm [shape: f32[128,128], index: 1, kind: input, shape index: {}]
  %s2 = inlined_call_operand.hbm [shape: f32[4,128], index: 2, kind: output, shape index: {}]
  %s3 = sld [smem:[#allocation0]]
  $region26: #{tpu_custom_call.1} parent=0
    _
  %s5 = ssub.s32 1, %s3
  %s6 = scalar_select 0, %s5, %s3
  $region1: #{tpu_custom_call.1} parent=0
    #allocation2 [shape = 'u8[2048]{0}', space=vmem, size = 0x800, scoped, tag = 'input window, operand 0, single buffered']
    #allocation3 [shape = 's32[1]{0}', space=sflag, size = 0x4, scoped, tag = 'scoped memory for tpu_custom_call.1']
    #allocation4 [shape = 's32[1]{0}', space=sflag, size = 0x4, scoped, tag = 'scoped memory for tpu_custom_call.1']
    #allocation5 [shape = 'u8[65536]{0}', space=vmem, size = 0x10000, scoped, tag = 'input window, operand 1, single buffered']
    #allocation6 [shape = 's32[1]{0}', space=sflag, size = 0x4, scoped, tag = 'scoped memory for tpu_custom_call.1']
    #allocation7 [shape = 'u8[2048]{0}', space=vmem, size = 0x800, scoped, tag = 'output window, operand 0, single buffered']
    %7 = vsyncpa [#allocation3], 0
    %8 = vsyncpa [#allocation6], 0
    %9 = vsyncpa [#allocation4], 0
    // Predicated region
    $region2: #{tpu_custom_call.1} parent=1 // pred_check
      _
    $region3: #{tpu_custom_call.1} parent=1 // pred_check_branch
      %11 = sbr.rel (0) target = $region5
    $region4: #{tpu_custom_call.1} parent=1 // pred_region
      %13 = vsyncadd [#allocation3], 0
      %s15 = sshll.u32 %s0, 4
      %s16 = int_to_ptr.hbm [resolvable:$true] %s15
      %s17 = sshll.u32 [#allocation2], 4
      %s18 = int_to_ptr.vmem [resolvable:$true] %s17
      %20 = dma.hbm_to_vmem [thread:$0]  %s16, 64, %s18, [#allocation3]
    $region5: #{tpu_custom_call.1} parent=1 // pred_fallthru
      _
    // Predicated region
    $region6: #{tpu_custom_call.1} parent=1 // pred_check
      _
    $region7: #{tpu_custom_call.1} parent=1 // pred_check_branch
      %22 = sbr.rel (0) target = $region9
    $region8: #{tpu_custom_call.1} parent=1 // pred_region
      %24 = vsyncadd [#allocation6], 0
      %s25 = sshll.u32 %s1, 4
      %s26 = int_to_ptr.hbm [resolvable:$true] %s25
      %s27 = sshll.u32 [#allocation5], 4
      %s28 = int_to_ptr.vmem [resolvable:$true] %s27
      %33 = dma.hbm_to_vmem [thread:$0]  %s26, 2048, %s28, [#allocation6], 128, 128, 8
    $region9: #{tpu_custom_call.1} parent=1 // pred_fallthru
      _
    // Predicated region
    $region10: #{tpu_custom_call.1} parent=1 // pred_check
      _
    $region11: #{tpu_custom_call.1} parent=1 // pred_check_branch
      %35 = sbr.rel (0) target = $region13
    $region12: #{tpu_custom_call.1} parent=1 // pred_region
      %37 = dma.done [#allocation3], 64
    $region13: #{tpu_custom_call.1} parent=1 // pred_fallthru
      _
    // Predicated region
    $region14: #{tpu_custom_call.1} parent=1 // pred_check
      _
    $region15: #{tpu_custom_call.1} parent=1 // pred_check_branch
      %39 = sbr.rel (0) target = $region17
    $region16: #{tpu_custom_call.1} parent=1 // pred_region
      %41 = dma.done [#allocation6], 2048
    $region17: #{tpu_custom_call.1} parent=1 // pred_fallthru
      _
    %v42 = vld [vmem:[#allocation2] sm:$0xf]
    %v43 = vmul.f32 %v42, %v42
    %v44 = vld [vmem:[#allocation5] sm:$0xff]
    %v45 = vld [vmem:[#allocation5 + $0x8] sm:$0xff]
    %v46 = vld [vmem:[#allocation5 + $0x10] sm:$0xff]
    %v47 = vld [vmem:[#allocation5 + $0x18] sm:$0xff]
    %v48 = vld [vmem:[#allocation5 + $0x20] sm:$0xff]
    %v49 = vld [vmem:[#allocation5 + $0x28] sm:$0xff]
    %v50 = vld [vmem:[#allocation5 + $0x30] sm:$0xff]
    %v51 = vld [vmem:[#allocation5 + $0x38] sm:$0xff]
    %v52 = vld [vmem:[#allocation5 + $0x40] sm:$0xff]
    %v53 = vld [vmem:[#allocation5 + $0x48] sm:$0xff]
    %v54 = vld [vmem:[#allocation5 + $0x50] sm:$0xff]
    %v55 = vld [vmem:[#allocation5 + $0x58] sm:$0xff]
    %v56 = vld [vmem:[#allocation5 + $0x60] sm:$0xff]
    %v57 = vld [vmem:[#allocation5 + $0x68] sm:$0xff]
    %v58 = vld [vmem:[#allocation5 + $0x70] sm:$0xff]
    %v59 = vld [vmem:[#allocation5 + $0x78] sm:$0xff]
    %v60 = vand.u32 %v59, 4294901760
    %61 = vmatpush.msra.mxu0 %v60
    %v62 = vand.u32 %v58, 4294901760
    %63 = vmatpush.msra.mxu0 %v62
    %v64 = vand.u32 %v57, 4294901760
    %65 = vmatpush.msra.mxu0 %v64
    %v66 = vand.u32 %v56, 4294901760
    %67 = vmatpush.msra.mxu0 %v66
    %v68 = vand.u32 %v55, 4294901760
    %69 = vmatpush.msra.mxu0 %v68
    %v70 = vand.u32 %v54, 4294901760
    %71 = vmatpush.msra.mxu0 %v70
    %v72 = vand.u32 %v53, 4294901760
    %73 = vmatpush.msra.mxu0 %v72
    %v74 = vand.u32 %v52, 4294901760
    %75 = vmatpush.msra.mxu0 %v74
    %v76 = vand.u32 %v51, 4294901760
    %77 = vmatpush.msra.mxu0 %v76
    %v78 = vand.u32 %v50, 4294901760
    %79 = vmatpush.msra.mxu0 %v78
    %v80 = vand.u32 %v49, 4294901760
    %81 = vmatpush.msra.mxu0 %v80
    %v82 = vand.u32 %v48, 4294901760
    %83 = vmatpush.msra.mxu0 %v82
    %v84 = vand.u32 %v47, 4294901760
    %85 = vmatpush.msra.mxu0 %v84
    %v86 = vand.u32 %v46, 4294901760
    %87 = vmatpush.msra.mxu0 %v86
    %v88 = vand.u32 %v45, 4294901760
    %89 = vmatpush.msra.mxu0 %v88
    %v90 = vand.u32 %v44, 4294901760
    %91 = vmatpush.msra.mxu0 %v90
    %v92 = vand.u32 %v43, 4294901760
    %v93 = vsub.f32 %v43, %v92
    %v94 = vand.u32 %v93, 4294901760
    %v95 = vsub.f32 %v93, %v94
    %v96 = vand.u32 %v95, 4294901760
    %97 = vmatmul.f32.gmra.mxu0 %v96
    %v98 = vpop.f32.mrf.mxu0
    %v99 = vadd.f32 0.0, %v98
    %100 = vdwg.mxu0
    %v101 = vand.u32 %v59, 4294901760
    %v102 = vsub.f32 %v59, %v101
    %v103 = vand.u32 %v102, 4294901760
    %v104 = vsub.f32 %v102, %v103
    %v105 = vand.u32 %v104, 4294901760
    %106 = vmatpush.msra.mxu0 %v105
    %v107 = vand.u32 %v58, 4294901760
    %v108 = vsub.f32 %v58, %v107
    %v109 = vand.u32 %v108, 4294901760
    %v110 = vsub.f32 %v108, %v109
    %v111 = vand.u32 %v110, 4294901760
    %112 = vmatpush.msra.mxu0 %v111
    %v113 = vand.u32 %v57, 4294901760
    %v114 = vsub.f32 %v57, %v113
    %v115 = vand.u32 %v114, 4294901760
    %v116 = vsub.f32 %v114, %v115
    %v117 = vand.u32 %v116, 4294901760
    %118 = vmatpush.msra.mxu0 %v117
    %v119 = vand.u32 %v56, 4294901760
    %v120 = vsub.f32 %v56, %v119
    %v121 = vand.u32 %v120, 4294901760
    %v122 = vsub.f32 %v120, %v121
    %v123 = vand.u32 %v122, 4294901760
    %124 = vmatpush.msra.mxu0 %v123
    %v125 = vand.u32 %v55, 4294901760
    %v126 = vsub.f32 %v55, %v125
    %v127 = vand.u32 %v126, 4294901760
    %v128 = vsub.f32 %v126, %v127
    %v129 = vand.u32 %v128, 4294901760
    %130 = vmatpush.msra.mxu0 %v129
    %v131 = vand.u32 %v54, 4294901760
    %v132 = vsub.f32 %v54, %v131
    %v133 = vand.u32 %v132, 4294901760
    %v134 = vsub.f32 %v132, %v133
    %v135 = vand.u32 %v134, 4294901760
    %136 = vmatpush.msra.mxu0 %v135
    %v137 = vand.u32 %v53, 4294901760
    %v138 = vsub.f32 %v53, %v137
    %v139 = vand.u32 %v138, 4294901760
    %v140 = vsub.f32 %v138, %v139
    %v141 = vand.u32 %v140, 4294901760
    %142 = vmatpush.msra.mxu0 %v141
    %v143 = vand.u32 %v52, 4294901760
    %v144 = vsub.f32 %v52, %v143
    %v145 = vand.u32 %v144, 4294901760
    %v146 = vsub.f32 %v144, %v145
    %v147 = vand.u32 %v146, 4294901760
    %148 = vmatpush.msra.mxu0 %v147
    %v149 = vand.u32 %v51, 4294901760
    %v150 = vsub.f32 %v51, %v149
    %v151 = vand.u32 %v150, 4294901760
    %v152 = vsub.f32 %v150, %v151
    %v153 = vand.u32 %v152, 4294901760
    %154 = vmatpush.msra.mxu0 %v153
    %v155 = vand.u32 %v50, 4294901760
    %v156 = vsub.f32 %v50, %v155
    %v157 = vand.u32 %v156, 4294901760
    %v158 = vsub.f32 %v156, %v157
    %v159 = vand.u32 %v158, 4294901760
    %160 = vmatpush.msra.mxu0 %v159
    %v161 = vand.u32 %v49, 4294901760
    %v162 = vsub.f32 %v49, %v161
    %v163 = vand.u32 %v162, 4294901760
    %v164 = vsub.f32 %v162, %v163
    %v165 = vand.u32 %v164, 4294901760
    %166 = vmatpush.msra.mxu0 %v165
    %v167 = vand.u32 %v48, 4294901760
    %v168 = vsub.f32 %v48, %v167
    %v169 = vand.u32 %v168, 4294901760
    %v170 = vsub.f32 %v168, %v169
    %v171 = vand.u32 %v170, 4294901760
    %172 = vmatpush.msra.mxu0 %v171
    %v173 = vand.u32 %v47, 4294901760
    %v174 = vsub.f32 %v47, %v173
    %v175 = vand.u32 %v174, 4294901760
    %v176 = vsub.f32 %v174, %v175
    %v177 = vand.u32 %v176, 4294901760
    %178 = vmatpush.msra.mxu0 %v177
    %v179 = vand.u32 %v46, 4294901760
    %v180 = vsub.f32 %v46, %v179
    %v181 = vand.u32 %v180, 4294901760
    %v182 = vsub.f32 %v180, %v181
    %v183 = vand.u32 %v182, 4294901760
    %184 = vmatpush.msra.mxu0 %v183
    %v185 = vand.u32 %v45, 4294901760
    %v186 = vsub.f32 %v45, %v185
    %v187 = vand.u32 %v186, 4294901760
    %v188 = vsub.f32 %v186, %v187
    %v189 = vand.u32 %v188, 4294901760
    %190 = vmatpush.msra.mxu0 %v189
    %v191 = vand.u32 %v44, 4294901760
    %v192 = vsub.f32 %v44, %v191
    %v193 = vand.u32 %v192, 4294901760
    %v194 = vsub.f32 %v192, %v193
    %v195 = vand.u32 %v194, 4294901760
    %196 = vmatpush.msra.mxu0 %v195
    %v197 = vand.u32 %v43, 4294901760
    %198 = vmatmul.f32.gmra.mxu0 %v197
    %v199 = vpop.f32.mrf.mxu0
    %v200 = vadd.f32 %v99, %v199
    %201 = vdwg.mxu0
    %v202 = vand.u32 %v59, 4294901760
    %v203 = vsub.f32 %v59, %v202
    %204 = vmatpush.msra.mxu0 %v203
    %v205 = vand.u32 %v58, 4294901760
    %v206 = vsub.f32 %v58, %v205
    %207 = vmatpush.msra.mxu0 %v206
    %v208 = vand.u32 %v57, 4294901760
    %v209 = vsub.f32 %v57, %v208
    %210 = vmatpush.msra.mxu0 %v209
    %v211 = vand.u32 %v56, 4294901760
    %v212 = vsub.f32 %v56, %v211
    %213 = vmatpush.msra.mxu0 %v212
    %v214 = vand.u32 %v55, 4294901760
    %v215 = vsub.f32 %v55, %v214
    %216 = vmatpush.msra.mxu0 %v215
    %v217 = vand.u32 %v54, 4294901760
    %v218 = vsub.f32 %v54, %v217
    %219 = vmatpush.msra.mxu0 %v218
    %v220 = vand.u32 %v53, 4294901760
    %v221 = vsub.f32 %v53, %v220
    %222 = vmatpush.msra.mxu0 %v221
    %v223 = vand.u32 %v52, 4294901760
    %v224 = vsub.f32 %v52, %v223
    %225 = vmatpush.msra.mxu0 %v224
    %v226 = vand.u32 %v51, 4294901760
    %v227 = vsub.f32 %v51, %v226
    %228 = vmatpush.msra.mxu0 %v227
    %v229 = vand.u32 %v50, 4294901760
    %v230 = vsub.f32 %v50, %v229
    %231 = vmatpush.msra.mxu0 %v230
    %v232 = vand.u32 %v49, 4294901760
    %v233 = vsub.f32 %v49, %v232
    %234 = vmatpush.msra.mxu0 %v233
    %v235 = vand.u32 %v48, 4294901760
    %v236 = vsub.f32 %v48, %v235
    %237 = vmatpush.msra.mxu0 %v236
    %v238 = vand.u32 %v47, 4294901760
    %v239 = vsub.f32 %v47, %v238
    %240 = vmatpush.msra.mxu0 %v239
    %v241 = vand.u32 %v46, 4294901760
    %v242 = vsub.f32 %v46, %v241
    %243 = vmatpush.msra.mxu0 %v242
    %v244 = vand.u32 %v45, 4294901760
    %v245 = vsub.f32 %v45, %v244
    %246 = vmatpush.msra.mxu0 %v245
    %v247 = vand.u32 %v44, 4294901760
    %v248 = vsub.f32 %v44, %v247
    %249 = vmatpush.msra.mxu0 %v248
    %v250 = vand.u32 %v43, 4294901760
    %v251 = vsub.f32 %v43, %v250
    %252 = vmatmul.f32.gmra.mxu0 %v251
    %v253 = vpop.f32.mrf.mxu0
    %v254 = vadd.f32 %v200, %v253
    %255 = vdwg.mxu0
    %v256 = vand.u32 %v59, 4294901760
    %257 = vmatpush.msra.mxu0 %v256
    %v258 = vand.u32 %v58, 4294901760
    %259 = vmatpush.msra.mxu0 %v258
    %v260 = vand.u32 %v57, 4294901760
    %261 = vmatpush.msra.mxu0 %v260
    %v262 = vand.u32 %v56, 4294901760
    %263 = vmatpush.msra.mxu0 %v262
    %v264 = vand.u32 %v55, 4294901760
    %265 = vmatpush.msra.mxu0 %v264
    %v266 = vand.u32 %v54, 4294901760
    %267 = vmatpush.msra.mxu0 %v266
    %v268 = vand.u32 %v53, 4294901760
    %269 = vmatpush.msra.mxu0 %v268
    %v270 = vand.u32 %v52, 4294901760
    %271 = vmatpush.msra.mxu0 %v270
    %v272 = vand.u32 %v51, 4294901760
    %273 = vmatpush.msra.mxu0 %v272
    %v274 = vand.u32 %v50, 4294901760
    %275 = vmatpush.msra.mxu0 %v274
    %v276 = vand.u32 %v49, 4294901760
    %277 = vmatpush.msra.mxu0 %v276
    %v278 = vand.u32 %v48, 4294901760
    %279 = vmatpush.msra.mxu0 %v278
    %v280 = vand.u32 %v47, 4294901760
    %281 = vmatpush.msra.mxu0 %v280
    %v282 = vand.u32 %v46, 4294901760
    %283 = vmatpush.msra.mxu0 %v282
    %v284 = vand.u32 %v45, 4294901760
    %285 = vmatpush.msra.mxu0 %v284
    %v286 = vand.u32 %v44, 4294901760
    %287 = vmatpush.msra.mxu0 %v286
    %v288 = vand.u32 %v43, 4294901760
    %v289 = vsub.f32 %v43, %v288
    %v290 = vand.u32 %v289, 4294901760
    %291 = vmatmul.f32.gmra.mxu0 %v290
    %v292 = vpop.f32.mrf.mxu0
    %v293 = vadd.f32 %v254, %v292
    %294 = vdwg.mxu0
    %v295 = vand.u32 %v59, 4294901760
    %v296 = vsub.f32 %v59, %v295
    %v297 = vand.u32 %v296, 4294901760
    %298 = vmatpush.msra.mxu0 %v297
    %v299 = vand.u32 %v58, 4294901760
    %v300 = vsub.f32 %v58, %v299
    %v301 = vand.u32 %v300, 4294901760
    %302 = vmatpush.msra.mxu0 %v301
    %v303 = vand.u32 %v57, 4294901760
    %v304 = vsub.f32 %v57, %v303
    %v305 = vand.u32 %v304, 4294901760
    %306 = vmatpush.msra.mxu0 %v305
    %v307 = vand.u32 %v56, 4294901760
    %v308 = vsub.f32 %v56, %v307
    %v309 = vand.u32 %v308, 4294901760
    %310 = vmatpush.msra.mxu0 %v309
    %v311 = vand.u32 %v55, 4294901760
    %v312 = vsub.f32 %v55, %v311
    %v313 = vand.u32 %v312, 4294901760
    %314 = vmatpush.msra.mxu0 %v313
    %v315 = vand.u32 %v54, 4294901760
    %v316 = vsub.f32 %v54, %v315
    %v317 = vand.u32 %v316, 4294901760
    %318 = vmatpush.msra.mxu0 %v317
    %v319 = vand.u32 %v53, 4294901760
    %v320 = vsub.f32 %v53, %v319
    %v321 = vand.u32 %v320, 4294901760
    %322 = vmatpush.msra.mxu0 %v321
    %v323 = vand.u32 %v52, 4294901760
    %v324 = vsub.f32 %v52, %v323
    %v325 = vand.u32 %v324, 4294901760
    %326 = vmatpush.msra.mxu0 %v325
    %v327 = vand.u32 %v51, 4294901760
    %v328 = vsub.f32 %v51, %v327
    %v329 = vand.u32 %v328, 4294901760
    %330 = vmatpush.msra.mxu0 %v329
    %v331 = vand.u32 %v50, 4294901760
    %v332 = vsub.f32 %v50, %v331
    %v333 = vand.u32 %v332, 4294901760
    %334 = vmatpush.msra.mxu0 %v333
    %v335 = vand.u32 %v49, 4294901760
    %v336 = vsub.f32 %v49, %v335
    %v337 = vand.u32 %v336, 4294901760
    %338 = vmatpush.msra.mxu0 %v337
    %v339 = vand.u32 %v48, 4294901760
    %v340 = vsub.f32 %v48, %v339
    %v341 = vand.u32 %v340, 4294901760
    %342 = vmatpush.msra.mxu0 %v341
    %v343 = vand.u32 %v47, 4294901760
    %v344 = vsub.f32 %v47, %v343
    %v345 = vand.u32 %v344, 4294901760
    %346 = vmatpush.msra.mxu0 %v345
    %v347 = vand.u32 %v46, 4294901760
    %v348 = vsub.f32 %v46, %v347
    %v349 = vand.u32 %v348, 4294901760
    %350 = vmatpush.msra.mxu0 %v349
    %v351 = vand.u32 %v45, 4294901760
    %v352 = vsub.f32 %v45, %v351
    %v353 = vand.u32 %v352, 4294901760
    %354 = vmatpush.msra.mxu0 %v353
    %v355 = vand.u32 %v44, 4294901760
    %v356 = vsub.f32 %v44, %v355
    %v357 = vand.u32 %v356, 4294901760
    %358 = vmatpush.msra.mxu0 %v357
    %v359 = vand.u32 %v43, 4294901760
    %360 = vmatmul.f32.gmra.mxu0 %v359
    %v361 = vpop.f32.mrf.mxu0
    %v362 = vadd.f32 %v293, %v361
    %363 = vdwg.mxu0
    %v364 = vand.u32 %v59, 4294901760
    %365 = vmatpush.msra.mxu0 %v364
    %v366 = vand.u32 %v58, 4294901760
    %367 = vmatpush.msra.mxu0 %v366
    %v368 = vand.u32 %v57, 4294901760
    %369 = vmatpush.msra.mxu0 %v368
    %v370 = vand.u32 %v56, 4294901760
    %371 = vmatpush.msra.mxu0 %v370
    %v372 = vand.u32 %v55, 4294901760
    %373 = vmatpush.msra.mxu0 %v372
    %v374 = vand.u32 %v54, 4294901760
    %375 = vmatpush.msra.mxu0 %v374
    %v376 = vand.u32 %v53, 4294901760
    %377 = vmatpush.msra.mxu0 %v376
    %v378 = vand.u32 %v52, 4294901760
    %379 = vmatpush.msra.mxu0 %v378
    %v380 = vand.u32 %v51, 4294901760
    %381 = vmatpush.msra.mxu0 %v380
    %v382 = vand.u32 %v50, 4294901760
    %383 = vmatpush.msra.mxu0 %v382
    %v384 = vand.u32 %v49, 4294901760
    %385 = vmatpush.msra.mxu0 %v384
    %v386 = vand.u32 %v48, 4294901760
    %387 = vmatpush.msra.mxu0 %v386
    %v388 = vand.u32 %v47, 4294901760
    %389 = vmatpush.msra.mxu0 %v388
    %v390 = vand.u32 %v46, 4294901760
    %391 = vmatpush.msra.mxu0 %v390
    %v392 = vand.u32 %v45, 4294901760
    %393 = vmatpush.msra.mxu0 %v392
    %v394 = vand.u32 %v44, 4294901760
    %395 = vmatpush.msra.mxu0 %v394
    %v396 = vand.u32 %v43, 4294901760
    %397 = vmatmul.f32.gmra.mxu0 %v396
    %v398 = vpop.f32.mrf.mxu0
    %v399 = vadd.f32 %v362, %v398
    %400 = vdwg.mxu0
    %v401 = vrsqrt.pop %v399
    %v402 = vmul.f32 %v401, %v399
    %v403 = vmul.f32 %v402, %v401
    %v404 = vmul.f32 0.5, %v403
    %v405 = vsub.f32 1.5, %v404
    %v406 = vmul.f32 %v401, %v405
    %vm407 = vweird.f32 %v399
    %vm408 = vweird.f32 %v401
    %vm409 = vmor %vm407, %vm408
    %v410 = vsel %vm409, %v401, %v406
    %v411 = vmul.f32 %v42, %v410
    %412 = vst [vmem:[#allocation7] sm:$0xf] %v411
    // Predicated region
    $region18: #{tpu_custom_call.1} parent=1 // pred_check
      _
    $region19: #{tpu_custom_call.1} parent=1 // pred_check_branch
      %414 = sbr.rel (0) target = $region21
    $region20: #{tpu_custom_call.1} parent=1 // pred_region
      %416 = vsyncadd [#allocation4], 0
      %s418 = sshll.u32 [#allocation7], 4
      %s419 = int_to_ptr.vmem [resolvable:$true] %s418
      %s420 = sshll.u32 %s2, 4
      %s421 = int_to_ptr.hbm [resolvable:$true] %s420
      %423 = dma.vmem_to_hbm [thread:$0]  %s419, 64, %s421, [#allocation4]
    $region21: #{tpu_custom_call.1} parent=1 // pred_fallthru
      _
    // Predicated region
    $region22: #{tpu_custom_call.1} parent=1 // pred_check
      _
    $region23: #{tpu_custom_call.1} parent=1 // pred_check_branch
      %425 = sbr.rel (0) target = $region25
    $region24: #{tpu_custom_call.1} parent=1 // pred_region
      %427 = dma.done [#allocation4], 64
    $region25: #{tpu_custom_call.1} parent=1 // pred_fallthru
      _
    %428 = vsyncpa [#allocation3], 1
    %429 = vsyncpa [#allocation6], 1
    %430 = vsyncpa [#allocation4], 1

</llo_original>
